<compile_context>
chip_gen: v5e
topology: v5e:2x2
jax: 0.10.0
libtpu: 0.0.40
codegen_flags: <defaults>
</compile_context>

<pallas_src>
import functools

import jax
import jax.numpy as jnp
from jax.experimental import pallas as pl
from jax.experimental.pallas import tpu as pltpu

NUM_DIR = 8
BOARD_HEIGHT = 0
BOARD_WIDTH = 0
INPUT_SIZE = NUM_DIR + BOARD_WIDTH * BOARD_HEIGHT * 2   # 8
HIDDEN_SIZE = INPUT_SIZE                                # 8
OUTPUT_SIZE = NUM_DIR                                   # 8

_LANE = 128                 # TPU lane width
_DEFAULT_BLOCK_B = 32768    # max batch rows per grid step (multiple of 128)
_SMALL_BATCH_FALLBACK = 1024  # below this, fused jnp beats pad+transpose+kernel


def _round_up(n, m):
    return (n + m - 1) // m * m


def _cdiv(a, b):
    return (a + b - 1) // b


def preferred_compute_dtype():
    """bf16 on v6e/v7x (bf16 VPU + half the HBM bytes); f32 on v5e / unknown."""
    try:
        kind = jax.devices()[0].device_kind.lower()
    except Exception:  # pragma: no cover - no device / unusual backend
        return jnp.float32
    if "v6" in kind or "v7" in kind:
        return jnp.bfloat16
    return jnp.float32


def _pick_block_b(b_pad):
    """Largest lane-aligned tile <= 32K rows, but split so the 1-D parallel
    grid has >= 2 steps when possible (lights up both v7x TensorCores)."""
    two_step = _round_up(_cdiv(b_pad, 2), _LANE)
    return max(_LANE, min(_DEFAULT_BLOCK_B, two_step))


# --------------------------------------------------------------------------
# Kernel
# --------------------------------------------------------------------------
def _mlp_kernel(x_ref, w_ref, b_ref, o_ref):
    """One batch tile of the 3-layer MLP in batch-in-lanes layout.

    x_ref : (8, block_b)   -- x^T tile, batch on the 128-lane axis
    w_ref : (3, 8, 8)      -- stacked torch-layout weights, VMEM-resident
    b_ref : (3, 8, 1)      -- stacked biases
    o_ref : (8, block_b)   -- logits^T tile
    """
    bt = x_ref.shape[1]

    def layer(x, l):
        # h[o, :] = b[o] + sum_i W[o, i] * x[i, :]
        # Pure VPU: 8 (column x row) broadcast-FMAs over full (8, bt) vregs;
        # bias broadcast is hoisted once per layer as the accumulator init.
        w = w_ref[l]                                              # (8, 8)
        acc = jnp.broadcast_to(b_ref[l], (HIDDEN_SIZE, bt))       # (8, bt)
        for i in range(HIDDEN_SIZE):                              # static unroll
            acc = acc + w[:, i:i + 1] * x[i:i + 1, :]             # (8,1)*(1,bt)
        return acc

    x = x_ref[...]                                                # (8, bt)
    h1 = jnp.maximum(layer(x, 0), 0.0)                            # ReLU
    h2 = jnp.maximum(layer(h1, 1), 0.0)                           # ReLU
    o_ref[...] = layer(h2, 2).astype(o_ref.dtype)


def _pallas_mlp_t(xt, w_stack, b_stack, block_b):
    """Core pallas_call on features-first activations.

    xt      : (INPUT_SIZE, b_pad)  with b_pad a multiple of 128
    returns : (OUTPUT_SIZE, b_pad)
    """
    n_feat, b_pad = xt.shape
    dtype = xt.dtype
    itemsize = jnp.dtype(dtype).itemsize
    grid = (_cdiv(b_pad, block_b),)   # partial last block allowed

    cost = pl.CostEstimate(
        flops=2 * 3 * b_pad * HIDDEN_SIZE * HIDDEN_SIZE,
        transcendentals=0,
        bytes_accessed=(2 * b_pad * n_feat
                        + 3 * (HIDDEN_SIZE * HIDDEN_SIZE + HIDDEN_SIZE)) * itemsize,
    )

    return pl.pallas_call(
        _mlp_kernel,
        out_shape=jax.ShapeDtypeStruct((OUTPUT_SIZE, b_pad), dtype),
        grid=grid,
        in_specs=[
            pl.BlockSpec((INPUT_SIZE, block_b), lambda i: (0, i)),          # batch-tiled
            pl.BlockSpec((3, HIDDEN_SIZE, HIDDEN_SIZE), lambda i: (0, 0, 0)),  # resident
            pl.BlockSpec((3, HIDDEN_SIZE, 1), lambda i: (0, 0, 0)),             # resident
        ],
        out_specs=pl.BlockSpec((OUTPUT_SIZE, block_b), lambda i: (0, i)),
        compiler_params=pltpu.CompilerParams(dimension_semantics=("parallel",)),
        cost_estimate=cost,
    )(xt, w_stack, b_stack)


def _stack_params(params, cdt):
    w = jnp.stack([params["w1"], params["w2"], params["w3"]]).astype(cdt)  # (3,8,8)
    b = jnp.stack([params["b1"], params["b2"], params["b3"]]).astype(cdt)  # (3,8,1)
    return w, b


# --------------------------------------------------------------------------
# Wrappers
# --------------------------------------------------------------------------
@functools.partial(jax.jit, static_argnames=("block_b", "compute_dtype"))
def _forward_impl(x, params, *, block_b, compute_dtype):
    batch = x.shape[0]
    b_pad = _round_up(max(batch, 1), _LANE)
    cdt = jnp.dtype(compute_dtype)
    w_stack, b_stack = _stack_params(params, cdt)
    # Wrapper-side layout plumbing for the fixed (B, 8) interface; callers that
    # can hold activations features-first should use wind_nn_forward_t instead.
    xt = jnp.pad(x.astype(cdt), ((0, b_pad - batch), (0, 0))).T   # (8, b_pad)
    out_t = _pallas_mlp_t(xt, w_stack, b_stack, block_b)
    return out_t[:, :batch].T                                      # (batch, 8)


@functools.partial(jax.jit, static_argnames=("block_b", "compute_dtype"))
def _forward_t_impl(xt, params, *, block_b, compute_dtype):
    batch = xt.shape[1]
    b_pad = _round_up(max(batch, 1), _LANE)
    cdt = jnp.dtype(compute_dtype)
    w_stack, b_stack = _stack_params(params, cdt)
    xt = jnp.pad(xt.astype(cdt), ((0, 0), (0, b_pad - batch)))     # (8, b_pad)
    out_t = _pallas_mlp_t(xt, w_stack, b_stack, block_b)
    return out_t[:, :batch]                                        # (8, batch)


def reference_forward(x, p):
    """Pure-JAX reference: identical math to torch's nn.Sequential stack."""
    h1 = jnp.maximum(x @ p["w1"].T + p["b1"][:, 0], 0.0)
    h2 = jnp.maximum(h1 @ p["w2"].T + p["b2"][:, 0], 0.0)
    return h2 @ p["w3"].T + p["b3"][:, 0]


_reference_jit = jax.jit(reference_forward)


def wind_nn_forward(x, params, *, block_b=None, compute_dtype=None,
                    small_batch_fallback=True):
    """Forward pass of WindNeuralNetwork.

    x      : (batch, INPUT_SIZE) float32 (PyTorch nn.Linear convention)
    params : dict w1,w2,w3 (out,in) and b1,b2,b3 (out,1), torch layout
    returns: (batch, OUTPUT_SIZE) in compute_dtype (f32 unless bf16 selected)
    """
    batch = x.shape[0]
    if compute_dtype is None:
        compute_dtype = preferred_compute_dtype()
    cdt = jnp.dtype(compute_dtype)
    if small_batch_fallback and batch < _SMALL_BATCH_FALLBACK:
        # Fixed costs (pad, transposes, launch, per-step overhead) dwarf the
        # sub-microsecond math at tiny batches; the fused jnp path wins.
        return _reference_jit(x, params).astype(cdt)
    if block_b is None:
        block_b = _pick_block_b(_round_up(max(batch, 1), _LANE))
    else:
        block_b = _round_up(int(block_b), _LANE)
    return _forward_impl(x, params, block_b=block_b, compute_dtype=cdt)


def wind_nn_forward_t(xt, params, *, block_b=None, compute_dtype=None):
    """Transpose-free entry point: xt is (INPUT_SIZE, batch) features-first;
    returns (OUTPUT_SIZE, batch).  Avoids the wrapper-side XLA transposes."""
    batch = xt.shape[1]
    if compute_dtype is None:
        compute_dtype = preferred_compute_dtype()
    cdt = jnp.dtype(compute_dtype)
    if block_b is None:
        block_b = _pick_block_b(_round_up(max(batch, 1), _LANE))
    else:
        block_b = _round_up(int(block_b), _LANE)
    return _forward_t_impl(xt, params, block_b=block_b, compute_dtype=cdt)


def init_params(key):
    """Mimics torch.nn.Linear default init: U[-1/sqrt(fan_in), 1/sqrt(fan_in)]."""
    def linear(k, fan_in, fan_out):
        kw, kb = jax.random.split(k)
        bound = 1.0 / jnp.sqrt(jnp.float32(fan_in))
        w = jax.random.uniform(kw, (fan_out, fan_in), jnp.float32, -bound, bound)
        b = jax.random.uniform(kb, (fan_out, 1), jnp.float32, -bound, bound)
        return w, b

    k1, k2, k3 = jax.random.split(key, 3)
    w1, b1 = linear(k1, INPUT_SIZE, HIDDEN_SIZE)
    w2, b2 = linear(k2, HIDDEN_SIZE, HIDDEN_SIZE)
    w3, b3 = linear(k3, HIDDEN_SIZE, OUTPUT_SIZE)
    return {"w1": w1, "b1": b1, "w2": w2, "b2": b2, "w3": w3, "b3": b3}


if __name__ == "__main__":
    key = jax.random.PRNGKey(0)
    k_params, k_x1, k_x2 = jax.random.split(key, 3)
    params = init_params(k_params)

    # 1) Small-shape check through the Pallas kernel itself (f32, fallback off
    #    so the kernel is exercised; bit-comparable to the reference).
    batch = 2
    x = jax.random.normal(k_x1, (batch, INPUT_SIZE), jnp.float32)
    out = jax.block_until_ready(
        wind_nn_forward(x, params, compute_dtype=jnp.float32,
                        small_batch_fallback=False))
    ref = reference_forward(x, params)
    assert out.shape == (batch, OUTPUT_SIZE)
    assert jnp.allclose(out, ref, atol=1e-5, rtol=1e-5), "Pallas mismatch (batch=2)"

    # 2) Ragged batch, 2-step parallel grid, auto dtype (bf16 on v6e/v7x).
    batch2 = 2500   # -> b_pad=2560, block_b=1280, grid=(2,)
    x2 = jax.random.normal(k_x2, (batch2, INPUT_SIZE), jnp.float32)
    out2 = jax.block_until_ready(wind_nn_forward(x2, params))
    ref2 = reference_forward(x2, params)
    assert out2.shape == (batch2, OUTPUT_SIZE)
    if out2.dtype == jnp.bfloat16:
        assert jnp.allclose(out2.astype(jnp.float32), ref2, atol=1e-1, rtol=1e-1), \
            "Pallas mismatch (batch=2500, bf16)"
    else:
        assert jnp.allclose(out2, ref2, atol=1e-5, rtol=1e-5), \
            "Pallas mismatch (batch=2500, f32)"

    # 3) Partial final block (block_b=1024 over b_pad=2560 -> blocks 1024/1024/512).
    out3 = jax.block_until_ready(
        wind_nn_forward(x2, params, block_b=1024, compute_dtype=jnp.float32,
                        small_batch_fallback=False))
    assert jnp.allclose(out3, ref2, atol=1e-5, rtol=1e-5), \
        "Pallas mismatch (partial last block)"

    # 4) Transpose-free features-first entry point.
    out_t = jax.block_until_ready(
        wind_nn_forward_t(x.T, params, compute_dtype=jnp.float32))
    assert out_t.shape == (OUTPUT_SIZE, batch)
    assert jnp.allclose(out_t.T, ref, atol=1e-5, rtol=1e-5), \
        "Pallas mismatch (features-first)"

    # 5) Tiny-batch fast path returns matching values.
    out_fb = jax.block_until_ready(
        wind_nn_forward(x, params, compute_dtype=jnp.float32))
    assert jnp.allclose(out_fb, ref, atol=1e-5, rtol=1e-5), "fallback mismatch"

    print("KERNEL_OK")
</pallas_src>

<mosaic_0001>
module attributes {stable_mosaic.version = 11 : i64} {
  func.func @_mlp_kernel(%arg0: i32, %arg1: memref<8x128xf32, #tpu.memory_space<vmem>>, %arg2: memref<3x8x8xf32, #tpu.memory_space<vmem>>, %arg3: memref<3x8x1xf32, #tpu.memory_space<vmem>>, %arg4: memref<8x128xf32, #tpu.memory_space<vmem>>) attributes {dimension_semantics = [#tpu.dimension_semantics<parallel>], iteration_bounds = array<i64: 1>, scalar_prefetch = 0 : i64, scratch_operands = 0 : i64, tpu.core_type = #tpu.core_type<tc>, window_params = [{transform_indices = @transform_0, window_bounds = array<i64: 8, 128>}, {pipeline_mode = #tpu.pipeline_mode<synchronous>, transform_indices = @transform_1, window_bounds = array<i64: 3, 8, 8>}, {pipeline_mode = #tpu.pipeline_mode<synchronous>, transform_indices = @transform_2, window_bounds = array<i64: 3, 8, 1>}, {transform_indices = @transform_3, window_bounds = array<i64: 8, 128>}]} {
    %c0 = arith.constant 0 : index
    %c0_0 = arith.constant 0 : index
    %0 = vector.load %arg1[%c0, %c0_0] : memref<8x128xf32, #tpu.memory_space<vmem>>, vector<8x128xf32>
    %c0_1 = arith.constant 0 : index
    %c0_2 = arith.constant 0 : index
    %c0_3 = arith.constant 0 : index
    %1 = vector.load %arg2[%c0_1, %c0_2, %c0_3] : memref<3x8x8xf32, #tpu.memory_space<vmem>>, vector<1x8x8xf32>
    %2 = vector.shape_cast %1 : vector<1x8x8xf32> to vector<8x8xf32>
    %c0_4 = arith.constant 0 : index
    %c0_5 = arith.constant 0 : index
    %c0_6 = arith.constant 0 : index
    %3 = vector.load %arg3[%c0_4, %c0_5, %c0_6] : memref<3x8x1xf32, #tpu.memory_space<vmem>>, vector<1x8x1xf32>
    %4 = vector.shape_cast %3 : vector<1x8x1xf32> to vector<8x1xf32>
    %5 = vector.shape_cast %4 : vector<8x1xf32> to vector<8x1xf32>
    %6 = vector.broadcast %5 : vector<8x1xf32> to vector<8x128xf32>
    %7 = vector.extract_strided_slice %2 {offsets = [0, 0], sizes = [8, 1], strides = [1, 1]} : vector<8x8xf32> to vector<8x1xf32>
    %8 = vector.extract_strided_slice %0 {offsets = [0, 0], sizes = [1, 128], strides = [1, 1]} : vector<8x128xf32> to vector<1x128xf32>
    %9 = vector.broadcast %7 : vector<8x1xf32> to vector<8x128xf32>
    %10 = vector.broadcast %8 : vector<1x128xf32> to vector<8x128xf32>
    %11 = arith.mulf %9, %10 : vector<8x128xf32>
    %12 = arith.addf %6, %11 : vector<8x128xf32>
    %13 = vector.extract_strided_slice %2 {offsets = [0, 1], sizes = [8, 1], strides = [1, 1]} : vector<8x8xf32> to vector<8x1xf32>
    %14 = vector.extract_strided_slice %0 {offsets = [1, 0], sizes = [1, 128], strides = [1, 1]} : vector<8x128xf32> to vector<1x128xf32>
    %15 = vector.broadcast %13 : vector<8x1xf32> to vector<8x128xf32>
    %16 = vector.broadcast %14 : vector<1x128xf32> to vector<8x128xf32>
    %17 = arith.mulf %15, %16 : vector<8x128xf32>
    %18 = arith.addf %12, %17 : vector<8x128xf32>
    %19 = vector.extract_strided_slice %2 {offsets = [0, 2], sizes = [8, 1], strides = [1, 1]} : vector<8x8xf32> to vector<8x1xf32>
    %20 = vector.extract_strided_slice %0 {offsets = [2, 0], sizes = [1, 128], strides = [1, 1]} : vector<8x128xf32> to vector<1x128xf32>
    %21 = vector.broadcast %19 : vector<8x1xf32> to vector<8x128xf32>
    %22 = vector.broadcast %20 : vector<1x128xf32> to vector<8x128xf32>
    %23 = arith.mulf %21, %22 : vector<8x128xf32>
    %24 = arith.addf %18, %23 : vector<8x128xf32>
    %25 = vector.extract_strided_slice %2 {offsets = [0, 3], sizes = [8, 1], strides = [1, 1]} : vector<8x8xf32> to vector<8x1xf32>
    %26 = vector.extract_strided_slice %0 {offsets = [3, 0], sizes = [1, 128], strides = [1, 1]} : vector<8x128xf32> to vector<1x128xf32>
    %27 = vector.broadcast %25 : vector<8x1xf32> to vector<8x128xf32>
    %28 = vector.broadcast %26 : vector<1x128xf32> to vector<8x128xf32>
    %29 = arith.mulf %27, %28 : vector<8x128xf32>
    %30 = arith.addf %24, %29 : vector<8x128xf32>
    %31 = vector.extract_strided_slice %2 {offsets = [0, 4], sizes = [8, 1], strides = [1, 1]} : vector<8x8xf32> to vector<8x1xf32>
    %32 = vector.extract_strided_slice %0 {offsets = [4, 0], sizes = [1, 128], strides = [1, 1]} : vector<8x128xf32> to vector<1x128xf32>
    %33 = vector.broadcast %31 : vector<8x1xf32> to vector<8x128xf32>
    %34 = vector.broadcast %32 : vector<1x128xf32> to vector<8x128xf32>
    %35 = arith.mulf %33, %34 : vector<8x128xf32>
    %36 = arith.addf %30, %35 : vector<8x128xf32>
    %37 = vector.extract_strided_slice %2 {offsets = [0, 5], sizes = [8, 1], strides = [1, 1]} : vector<8x8xf32> to vector<8x1xf32>
    %38 = vector.extract_strided_slice %0 {offsets = [5, 0], sizes = [1, 128], strides = [1, 1]} : vector<8x128xf32> to vector<1x128xf32>
    %39 = vector.broadcast %37 : vector<8x1xf32> to vector<8x128xf32>
    %40 = vector.broadcast %38 : vector<1x128xf32> to vector<8x128xf32>
    %41 = arith.mulf %39, %40 : vector<8x128xf32>
    %42 = arith.addf %36, %41 : vector<8x128xf32>
    %43 = vector.extract_strided_slice %2 {offsets = [0, 6], sizes = [8, 1], strides = [1, 1]} : vector<8x8xf32> to vector<8x1xf32>
    %44 = vector.extract_strided_slice %0 {offsets = [6, 0], sizes = [1, 128], strides = [1, 1]} : vector<8x128xf32> to vector<1x128xf32>
    %45 = vector.broadcast %43 : vector<8x1xf32> to vector<8x128xf32>
    %46 = vector.broadcast %44 : vector<1x128xf32> to vector<8x128xf32>
    %47 = arith.mulf %45, %46 : vector<8x128xf32>
    %48 = arith.addf %42, %47 : vector<8x128xf32>
    %49 = vector.extract_strided_slice %2 {offsets = [0, 7], sizes = [8, 1], strides = [1, 1]} : vector<8x8xf32> to vector<8x1xf32>
    %50 = vector.extract_strided_slice %0 {offsets = [7, 0], sizes = [1, 128], strides = [1, 1]} : vector<8x128xf32> to vector<1x128xf32>
    %51 = vector.broadcast %49 : vector<8x1xf32> to vector<8x128xf32>
    %52 = vector.broadcast %50 : vector<1x128xf32> to vector<8x128xf32>
    %53 = arith.mulf %51, %52 : vector<8x128xf32>
    %54 = arith.addf %48, %53 : vector<8x128xf32>
    %cst = arith.constant 0.000000e+00 : f32
    %55 = vector.broadcast %cst : f32 to vector<8x128xf32>
    %56 = arith.maximumf %54, %55 : vector<8x128xf32>
    %c1 = arith.constant 1 : index
    %c0_7 = arith.constant 0 : index
    %c0_8 = arith.constant 0 : index
    %57 = vector.load %arg2[%c1, %c0_7, %c0_8] : memref<3x8x8xf32, #tpu.memory_space<vmem>>, vector<1x8x8xf32>
    %58 = vector.shape_cast %57 : vector<1x8x8xf32> to vector<8x8xf32>
    %c1_9 = arith.constant 1 : index
    %c0_10 = arith.constant 0 : index
    %c0_11 = arith.constant 0 : index
    %59 = vector.load %arg3[%c1_9, %c0_10, %c0_11] : memref<3x8x1xf32, #tpu.memory_space<vmem>>, vector<1x8x1xf32>
    %60 = vector.shape_cast %59 : vector<1x8x1xf32> to vector<8x1xf32>
    %61 = vector.shape_cast %60 : vector<8x1xf32> to vector<8x1xf32>
    %62 = vector.broadcast %61 : vector<8x1xf32> to vector<8x128xf32>
    %63 = vector.extract_strided_slice %58 {offsets = [0, 0], sizes = [8, 1], strides = [1, 1]} : vector<8x8xf32> to vector<8x1xf32>
    %64 = vector.extract_strided_slice %56 {offsets = [0, 0], sizes = [1, 128], strides = [1, 1]} : vector<8x128xf32> to vector<1x128xf32>
    %65 = vector.broadcast %63 : vector<8x1xf32> to vector<8x128xf32>
    %66 = vector.broadcast %64 : vector<1x128xf32> to vector<8x128xf32>
    %67 = arith.mulf %65, %66 : vector<8x128xf32>
    %68 = arith.addf %62, %67 : vector<8x128xf32>
    %69 = vector.extract_strided_slice %58 {offsets = [0, 1], sizes = [8, 1], strides = [1, 1]} : vector<8x8xf32> to vector<8x1xf32>
    %70 = vector.extract_strided_slice %56 {offsets = [1, 0], sizes = [1, 128], strides = [1, 1]} : vector<8x128xf32> to vector<1x128xf32>
    %71 = vector.broadcast %69 : vector<8x1xf32> to vector<8x128xf32>
    %72 = vector.broadcast %70 : vector<1x128xf32> to vector<8x128xf32>
    %73 = arith.mulf %71, %72 : vector<8x128xf32>
    %74 = arith.addf %68, %73 : vector<8x128xf32>
    %75 = vector.extract_strided_slice %58 {offsets = [0, 2], sizes = [8, 1], strides = [1, 1]} : vector<8x8xf32> to vector<8x1xf32>
    %76 = vector.extract_strided_slice %56 {offsets = [2, 0], sizes = [1, 128], strides = [1, 1]} : vector<8x128xf32> to vector<1x128xf32>
    %77 = vector.broadcast %75 : vector<8x1xf32> to vector<8x128xf32>
    %78 = vector.broadcast %76 : vector<1x128xf32> to vector<8x128xf32>
    %79 = arith.mulf %77, %78 : vector<8x128xf32>
    %80 = arith.addf %74, %79 : vector<8x128xf32>
    %81 = vector.extract_strided_slice %58 {offsets = [0, 3], sizes = [8, 1], strides = [1, 1]} : vector<8x8xf32> to vector<8x1xf32>
    %82 = vector.extract_strided_slice %56 {offsets = [3, 0], sizes = [1, 128], strides = [1, 1]} : vector<8x128xf32> to vector<1x128xf32>
    %83 = vector.broadcast %81 : vector<8x1xf32> to vector<8x128xf32>
    %84 = vector.broadcast %82 : vector<1x128xf32> to vector<8x128xf32>
    %85 = arith.mulf %83, %84 : vector<8x128xf32>
    %86 = arith.addf %80, %85 : vector<8x128xf32>
    %87 = vector.extract_strided_slice %58 {offsets = [0, 4], sizes = [8, 1], strides = [1, 1]} : vector<8x8xf32> to vector<8x1xf32>
    %88 = vector.extract_strided_slice %56 {offsets = [4, 0], sizes = [1, 128], strides = [1, 1]} : vector<8x128xf32> to vector<1x128xf32>
    %89 = vector.broadcast %87 : vector<8x1xf32> to vector<8x128xf32>
    %90 = vector.broadcast %88 : vector<1x128xf32> to vector<8x128xf32>
    %91 = arith.mulf %89, %90 : vector<8x128xf32>
    %92 = arith.addf %86, %91 : vector<8x128xf32>
    %93 = vector.extract_strided_slice %58 {offsets = [0, 5], sizes = [8, 1], strides = [1, 1]} : vector<8x8xf32> to vector<8x1xf32>
    %94 = vector.extract_strided_slice %56 {offsets = [5, 0], sizes = [1, 128], strides = [1, 1]} : vector<8x128xf32> to vector<1x128xf32>
    %95 = vector.broadcast %93 : vector<8x1xf32> to vector<8x128xf32>
    %96 = vector.broadcast %94 : vector<1x128xf32> to vector<8x128xf32>
    %97 = arith.mulf %95, %96 : vector<8x128xf32>
    %98 = arith.addf %92, %97 : vector<8x128xf32>
    %99 = vector.extract_strided_slice %58 {offsets = [0, 6], sizes = [8, 1], strides = [1, 1]} : vector<8x8xf32> to vector<8x1xf32>
    %100 = vector.extract_strided_slice %56 {offsets = [6, 0], sizes = [1, 128], strides = [1, 1]} : vector<8x128xf32> to vector<1x128xf32>
    %101 = vector.broadcast %99 : vector<8x1xf32> to vector<8x128xf32>
    %102 = vector.broadcast %100 : vector<1x128xf32> to vector<8x128xf32>
    %103 = arith.mulf %101, %102 : vector<8x128xf32>
    %104 = arith.addf %98, %103 : vector<8x128xf32>
    %105 = vector.extract_strided_slice %58 {offsets = [0, 7], sizes = [8, 1], strides = [1, 1]} : vector<8x8xf32> to vector<8x1xf32>
    %106 = vector.extract_strided_slice %56 {offsets = [7, 0], sizes = [1, 128], strides = [1, 1]} : vector<8x128xf32> to vector<1x128xf32>
    %107 = vector.broadcast %105 : vector<8x1xf32> to vector<8x128xf32>
    %108 = vector.broadcast %106 : vector<1x128xf32> to vector<8x128xf32>
    %109 = arith.mulf %107, %108 : vector<8x128xf32>
    %110 = arith.addf %104, %109 : vector<8x128xf32>
    %cst_12 = arith.constant 0.000000e+00 : f32
    %111 = vector.broadcast %cst_12 : f32 to vector<8x128xf32>
    %112 = arith.maximumf %110, %111 : vector<8x128xf32>
    %c2 = arith.constant 2 : index
    %c0_13 = arith.constant 0 : index
    %c0_14 = arith.constant 0 : index
    %113 = vector.load %arg2[%c2, %c0_13, %c0_14] : memref<3x8x8xf32, #tpu.memory_space<vmem>>, vector<1x8x8xf32>
    %114 = vector.shape_cast %113 : vector<1x8x8xf32> to vector<8x8xf32>
    %c2_15 = arith.constant 2 : index
    %c0_16 = arith.constant 0 : index
    %c0_17 = arith.constant 0 : index
    %115 = vector.load %arg3[%c2_15, %c0_16, %c0_17] : memref<3x8x1xf32, #tpu.memory_space<vmem>>, vector<1x8x1xf32>
    %116 = vector.shape_cast %115 : vector<1x8x1xf32> to vector<8x1xf32>
    %117 = vector.shape_cast %116 : vector<8x1xf32> to vector<8x1xf32>
    %118 = vector.broadcast %117 : vector<8x1xf32> to vector<8x128xf32>
    %119 = vector.extract_strided_slice %114 {offsets = [0, 0], sizes = [8, 1], strides = [1, 1]} : vector<8x8xf32> to vector<8x1xf32>
    %120 = vector.extract_strided_slice %112 {offsets = [0, 0], sizes = [1, 128], strides = [1, 1]} : vector<8x128xf32> to vector<1x128xf32>
    %121 = vector.broadcast %119 : vector<8x1xf32> to vector<8x128xf32>
    %122 = vector.broadcast %120 : vector<1x128xf32> to vector<8x128xf32>
    %123 = arith.mulf %121, %122 : vector<8x128xf32>
    %124 = arith.addf %118, %123 : vector<8x128xf32>
    %125 = vector.extract_strided_slice %114 {offsets = [0, 1], sizes = [8, 1], strides = [1, 1]} : vector<8x8xf32> to vector<8x1xf32>
    %126 = vector.extract_strided_slice %112 {offsets = [1, 0], sizes = [1, 128], strides = [1, 1]} : vector<8x128xf32> to vector<1x128xf32>
    %127 = vector.broadcast %125 : vector<8x1xf32> to vector<8x128xf32>
    %128 = vector.broadcast %126 : vector<1x128xf32> to vector<8x128xf32>
    %129 = arith.mulf %127, %128 : vector<8x128xf32>
    %130 = arith.addf %124, %129 : vector<8x128xf32>
    %131 = vector.extract_strided_slice %114 {offsets = [0, 2], sizes = [8, 1], strides = [1, 1]} : vector<8x8xf32> to vector<8x1xf32>
    %132 = vector.extract_strided_slice %112 {offsets = [2, 0], sizes = [1, 128], strides = [1, 1]} : vector<8x128xf32> to vector<1x128xf32>
    %133 = vector.broadcast %131 : vector<8x1xf32> to vector<8x128xf32>
    %134 = vector.broadcast %132 : vector<1x128xf32> to vector<8x128xf32>
    %135 = arith.mulf %133, %134 : vector<8x128xf32>
    %136 = arith.addf %130, %135 : vector<8x128xf32>
    %137 = vector.extract_strided_slice %114 {offsets = [0, 3], sizes = [8, 1], strides = [1, 1]} : vector<8x8xf32> to vector<8x1xf32>
    %138 = vector.extract_strided_slice %112 {offsets = [3, 0], sizes = [1, 128], strides = [1, 1]} : vector<8x128xf32> to vector<1x128xf32>
    %139 = vector.broadcast %137 : vector<8x1xf32> to vector<8x128xf32>
    %140 = vector.broadcast %138 : vector<1x128xf32> to vector<8x128xf32>
    %141 = arith.mulf %139, %140 : vector<8x128xf32>
    %142 = arith.addf %136, %141 : vector<8x128xf32>
    %143 = vector.extract_strided_slice %114 {offsets = [0, 4], sizes = [8, 1], strides = [1, 1]} : vector<8x8xf32> to vector<8x1xf32>
    %144 = vector.extract_strided_slice %112 {offsets = [4, 0], sizes = [1, 128], strides = [1, 1]} : vector<8x128xf32> to vector<1x128xf32>
    %145 = vector.broadcast %143 : vector<8x1xf32> to vector<8x128xf32>
    %146 = vector.broadcast %144 : vector<1x128xf32> to vector<8x128xf32>
    %147 = arith.mulf %145, %146 : vector<8x128xf32>
    %148 = arith.addf %142, %147 : vector<8x128xf32>
    %149 = vector.extract_strided_slice %114 {offsets = [0, 5], sizes = [8, 1], strides = [1, 1]} : vector<8x8xf32> to vector<8x1xf32>
    %150 = vector.extract_strided_slice %112 {offsets = [5, 0], sizes = [1, 128], strides = [1, 1]} : vector<8x128xf32> to vector<1x128xf32>
    %151 = vector.broadcast %149 : vector<8x1xf32> to vector<8x128xf32>
    %152 = vector.broadcast %150 : vector<1x128xf32> to vector<8x128xf32>
    %153 = arith.mulf %151, %152 : vector<8x128xf32>
    %154 = arith.addf %148, %153 : vector<8x128xf32>
    %155 = vector.extract_strided_slice %114 {offsets = [0, 6], sizes = [8, 1], strides = [1, 1]} : vector<8x8xf32> to vector<8x1xf32>
    %156 = vector.extract_strided_slice %112 {offsets = [6, 0], sizes = [1, 128], strides = [1, 1]} : vector<8x128xf32> to vector<1x128xf32>
    %157 = vector.broadcast %155 : vector<8x1xf32> to vector<8x128xf32>
    %158 = vector.broadcast %156 : vector<1x128xf32> to vector<8x128xf32>
    %159 = arith.mulf %157, %158 : vector<8x128xf32>
    %160 = arith.addf %154, %159 : vector<8x128xf32>
    %161 = vector.extract_strided_slice %114 {offsets = [0, 7], sizes = [8, 1], strides = [1, 1]} : vector<8x8xf32> to vector<8x1xf32>
    %162 = vector.extract_strided_slice %112 {offsets = [7, 0], sizes = [1, 128], strides = [1, 1]} : vector<8x128xf32> to vector<1x128xf32>
    %163 = vector.broadcast %161 : vector<8x1xf32> to vector<8x128xf32>
    %164 = vector.broadcast %162 : vector<1x128xf32> to vector<8x128xf32>
    %165 = arith.mulf %163, %164 : vector<8x128xf32>
    %166 = arith.addf %160, %165 : vector<8x128xf32>
    %c0_18 = arith.constant 0 : index
    %c0_19 = arith.constant 0 : index
    %167 = vector.load %arg4[%c0_18, %c0_19] : memref<8x128xf32, #tpu.memory_space<vmem>>, vector<8x128xf32>
    tpu.vector_store %arg4[%c0_18, %c0_19], %166 {strides = array<i32>} : memref<8x128xf32, #tpu.memory_space<vmem>>, vector<8x128xf32>,
    return
  }
  func.func @transform_0(%arg0: i32) -> (i32, i32) {
    %c0_i32 = arith.constant 0 : i32
    %c0_i32_0 = arith.constant 0 : i32
    return %c0_i32, %arg0 : i32, i32
  }
  func.func @transform_1(%arg0: i32) -> (i32, i32, i32) {
    %c0_i32 = arith.constant 0 : i32
    %c0_i32_0 = arith.constant 0 : i32
    %c0_i32_1 = arith.constant 0 : i32
    %c0_i32_2 = arith.constant 0 : i32
    return %c0_i32, %c0_i32_0, %c0_i32_1 : i32, i32, i32
  }
  func.func @transform_2(%arg0: i32) -> (i32, i32, i32) {
    %c0_i32 = arith.constant 0 : i32
    %c0_i32_0 = arith.constant 0 : i32
    %c0_i32_1 = arith.constant 0 : i32
    %c0_i32_2 = arith.constant 0 : i32
    return %c0_i32, %c0_i32_0, %c0_i32_1 : i32, i32, i32
  }
  func.func @transform_3(%arg0: i32) -> (i32, i32) {
    %c0_i32 = arith.constant 0 : i32
    %c0_i32_0 = arith.constant 0 : i32
    return %c0_i32, %arg0 : i32, i32
  }
}

</mosaic_0001>

<llo_original>
// kernel: _forward_impl.1
$region0: #{_forward_impl.1}
  #allocation0 [shape = 'u32[]', space=smem, size = 0x4, offset = 0x4, fixed_abs, tag = 'smem constant byte address 0x4 - core index']
  #allocation1 [shape = 'u32[72,128]{1,0:T(1,128)}', space=vmem, size = 0x9000, scoped, tag = 'internal scratch']
  %s0 = inlined_call_operand.vmem [shape: f32[8,128], index: 0, kind: input, shape index: {}]
  %s1 = inlined_call_operand.vmem [shape: f32[3,8,8], index: 1, kind: input, shape index: {}]
  %s2 = inlined_call_operand.vmem [shape: f32[3,8,1], index: 2, kind: input, shape index: {}]
  %s3 = inlined_call_operand.vmem [shape: f32[8,128], index: 3, kind: output, shape index: {}]
  %s4 = sld [smem:[#allocation0]]
  $region22: #{_forward_impl.1} parent=0
    _
  %s6 = ssub.s32 1, %s4
  %s7 = scalar_select 0, %s6, %s4
  // Predicated region
  $region2: #{_forward_impl.1} parent=0 // pred_check
    _
  $region3: #{_forward_impl.1} parent=0 // pred_check_branch
    %9 = sbr.rel (0) target = $region5
  $region4: #{_forward_impl.1} parent=0 // pred_region
    _
  $region5: #{_forward_impl.1} parent=0 // pred_fallthru
    _
  // Predicated region
  $region6: #{_forward_impl.1} parent=0 // pred_check
    _
  $region7: #{_forward_impl.1} parent=0 // pred_check_branch
    %11 = sbr.rel (0) target = $region9
  $region8: #{_forward_impl.1} parent=0 // pred_region
    _
  $region9: #{_forward_impl.1} parent=0 // pred_fallthru
    _
  // Predicated region
  $region10: #{_forward_impl.1} parent=0 // pred_check
    _
  $region11: #{_forward_impl.1} parent=0 // pred_check_branch
    %13 = sbr.rel (0) target = $region13
  $region12: #{_forward_impl.1} parent=0 // pred_region
    _
  $region13: #{_forward_impl.1} parent=0 // pred_fallthru
    _
  %v14 = vld [vmem:[%s0] sm:$0xff]
  %v15 = vld [vmem:[%s1] sm:$0xff]
  %v16 = vld [vmem:[%s2] sm:$0xff]
  %18 = vset.pattern.permute.xlu0 0
  %19 = vperm.xlu0 %18, %v16
  %v20 = vpop.permute.xlu0 %19
  %23 = vset.pattern.permute.xlu0 0
  %24 = vperm.xlu0 %23, %v15
  %v25 = vpop.permute.xlu0 %24
  %v27 = vperm.slane %v14, 0
  %v28 = vmul.f32 %v25, %v27
  %v29 = vadd.f32 %v20, %v28
  %30 = vset.pattern.permute.xlu0 1
  %31 = vperm.xlu0 %30, %v15
  %v32 = vpop.permute.xlu0 %31
  %v34 = vperm.slane %v14, 1
  %v35 = vmul.f32 %v32, %v34
  %v36 = vadd.f32 %v29, %v35
  %37 = vset.pattern.permute.xlu0 2
  %38 = vperm.xlu0 %37, %v15
  %v39 = vpop.permute.xlu0 %38
  %v41 = vperm.slane %v14, 2
  %v42 = vmul.f32 %v39, %v41
  %v43 = vadd.f32 %v36, %v42
  %44 = vset.pattern.permute.xlu0 3
  %45 = vperm.xlu0 %44, %v15
  %v46 = vpop.permute.xlu0 %45
  %v48 = vperm.slane %v14, 3
  %v49 = vmul.f32 %v46, %v48
  %v50 = vadd.f32 %v43, %v49
  %51 = vset.pattern.permute.xlu0 4
  %52 = vperm.xlu0 %51, %v15
  %v53 = vpop.permute.xlu0 %52
  %v55 = vperm.slane %v14, 4
  %v56 = vmul.f32 %v53, %v55
  %v57 = vadd.f32 %v50, %v56
  %58 = vset.pattern.permute.xlu0 5
  %59 = vperm.xlu0 %58, %v15
  %v60 = vpop.permute.xlu0 %59
  %v62 = vperm.slane %v14, 5
  %v63 = vmul.f32 %v60, %v62
  %v64 = vadd.f32 %v57, %v63
  %65 = vset.pattern.permute.xlu0 6
  %66 = vperm.xlu0 %65, %v15
  %v67 = vpop.permute.xlu0 %66
  %v69 = vperm.slane %v14, 6
  %v70 = vmul.f32 %v67, %v69
  %v71 = vadd.f32 %v64, %v70
  %72 = vset.pattern.permute.xlu0 7
  %73 = vperm.xlu0 %72, %v15
  %v74 = vpop.permute.xlu0 %73
  %v76 = vperm.slane %v14, 7
  %v77 = vmul.f32 %v74, %v76
  %v78 = vadd.f32 %v71, %v77
  %v79 = vmax.f32 %v78, 0.0
  %s80 = scalar_lea.vmem %s1, 8
  %v81 = vld [vmem:[%s80] sm:$0xff]
  %s82 = scalar_lea.vmem %s2, 8
  %v83 = vld [vmem:[%s82] sm:$0xff]
  %85 = vset.pattern.permute.xlu0 0
  %86 = vperm.xlu0 %85, %v83
  %v87 = vpop.permute.xlu0 %86
  %90 = vset.pattern.permute.xlu0 0
  %91 = vperm.xlu0 %90, %v81
  %v92 = vpop.permute.xlu0 %91
  %v94 = vperm.slane %v79, 0
  %v95 = vmul.f32 %v92, %v94
  %v96 = vadd.f32 %v87, %v95
  %97 = vset.pattern.permute.xlu0 1
  %98 = vperm.xlu0 %97, %v81
  %v99 = vpop.permute.xlu0 %98
  %v101 = vperm.slane %v79, 1
  %v102 = vmul.f32 %v99, %v101
  %v103 = vadd.f32 %v96, %v102
  %104 = vset.pattern.permute.xlu0 2
  %105 = vperm.xlu0 %104, %v81
  %v106 = vpop.permute.xlu0 %105
  %v108 = vperm.slane %v79, 2
  %v109 = vmul.f32 %v106, %v108
  %v110 = vadd.f32 %v103, %v109
  %111 = vset.pattern.permute.xlu0 3
  %112 = vperm.xlu0 %111, %v81
  %v113 = vpop.permute.xlu0 %112
  %v115 = vperm.slane %v79, 3
  %v116 = vmul.f32 %v113, %v115
  %v117 = vadd.f32 %v110, %v116
  %118 = vset.pattern.permute.xlu0 4
  %119 = vperm.xlu0 %118, %v81
  %v120 = vpop.permute.xlu0 %119
  %v122 = vperm.slane %v79, 4
  %v123 = vmul.f32 %v120, %v122
  %v124 = vadd.f32 %v117, %v123
  %125 = vset.pattern.permute.xlu0 5
  %126 = vperm.xlu0 %125, %v81
  %v127 = vpop.permute.xlu0 %126
  %v129 = vperm.slane %v79, 5
  %v130 = vmul.f32 %v127, %v129
  %v131 = vadd.f32 %v124, %v130
  %132 = vset.pattern.permute.xlu0 6
  %133 = vperm.xlu0 %132, %v81
  %v134 = vpop.permute.xlu0 %133
  %v136 = vperm.slane %v79, 6
  %v137 = vmul.f32 %v134, %v136
  %v138 = vadd.f32 %v131, %v137
  %139 = vset.pattern.permute.xlu0 7
  %140 = vperm.xlu0 %139, %v81
  %v141 = vpop.permute.xlu0 %140
  %v143 = vperm.slane %v79, 7
  %v144 = vmul.f32 %v141, %v143
  %v145 = vadd.f32 %v138, %v144
  %v146 = vmax.f32 %v145, 0.0
  %s147 = scalar_lea.vmem %s1, 16
  %v148 = vld [vmem:[%s147] sm:$0xff]
  %s149 = scalar_lea.vmem %s2, 16
  %v150 = vld [vmem:[%s149] sm:$0xff]
  %152 = vset.pattern.permute.xlu0 0
  %153 = vperm.xlu0 %152, %v150
  %v154 = vpop.permute.xlu0 %153
  %157 = vset.pattern.permute.xlu0 0
  %158 = vperm.xlu0 %157, %v148
  %v159 = vpop.permute.xlu0 %158
  %v161 = vperm.slane %v146, 0
  %v162 = vmul.f32 %v159, %v161
  %v163 = vadd.f32 %v154, %v162
  %164 = vset.pattern.permute.xlu0 1
  %165 = vperm.xlu0 %164, %v148
  %v166 = vpop.permute.xlu0 %165
  %v168 = vperm.slane %v146, 1
  %v169 = vmul.f32 %v166, %v168
  %v170 = vadd.f32 %v163, %v169
  %171 = vset.pattern.permute.xlu0 2
  %172 = vperm.xlu0 %171, %v148
  %v173 = vpop.permute.xlu0 %172
  %v175 = vperm.slane %v146, 2
  %v176 = vmul.f32 %v173, %v175
  %v177 = vadd.f32 %v170, %v176
  %178 = vset.pattern.permute.xlu0 3
  %179 = vperm.xlu0 %178, %v148
  %v180 = vpop.permute.xlu0 %179
  %v182 = vperm.slane %v146, 3
  %v183 = vmul.f32 %v180, %v182
  %v184 = vadd.f32 %v177, %v183
  %185 = vset.pattern.permute.xlu0 4
  %186 = vperm.xlu0 %185, %v148
  %v187 = vpop.permute.xlu0 %186
  %v189 = vperm.slane %v146, 4
  %v190 = vmul.f32 %v187, %v189
  %v191 = vadd.f32 %v184, %v190
  %192 = vset.pattern.permute.xlu0 5
  %193 = vperm.xlu0 %192, %v148
  %v194 = vpop.permute.xlu0 %193
  %v196 = vperm.slane %v146, 5
  %v197 = vmul.f32 %v194, %v196
  %v198 = vadd.f32 %v191, %v197
  %199 = vset.pattern.permute.xlu0 6
  %200 = vperm.xlu0 %199, %v148
  %v201 = vpop.permute.xlu0 %200
  %v203 = vperm.slane %v146, 6
  %v204 = vmul.f32 %v201, %v203
  %v205 = vadd.f32 %v198, %v204
  %206 = vset.pattern.permute.xlu0 7
  %207 = vperm.xlu0 %206, %v148
  %v208 = vpop.permute.xlu0 %207
  %v210 = vperm.slane %v146, 7
  %v211 = vmul.f32 %v208, %v210
  %v212 = vadd.f32 %v205, %v211
  %213 = vst [vmem:[%s3] sm:$0xff] %v212
  // Predicated region
  $region14: #{_forward_impl.1} parent=0 // pred_check
    _
  $region15: #{_forward_impl.1} parent=0 // pred_check_branch
    %215 = sbr.rel (0) target = $region17
  $region16: #{_forward_impl.1} parent=0 // pred_region
    _
  $region17: #{_forward_impl.1} parent=0 // pred_fallthru
    _
  // Predicated region
  $region18: #{_forward_impl.1} parent=0 // pred_check
    _
  $region19: #{_forward_impl.1} parent=0 // pred_check_branch
    %217 = sbr.rel (0) target = $region21
  $region20: #{_forward_impl.1} parent=0 // pred_region
    _
  $region21: #{_forward_impl.1} parent=0 // pred_fallthru
    _

</llo_original>
